<compile_context>
chip_gen: v7x
topology: tpu7x:2x2x1
jax: 0.10.0
libtpu: 0.0.40
codegen_flags: <defaults>
</compile_context>

<pallas_src>
import jax
import jax.numpy as jnp
from jax.experimental import pallas as pl
from jax.experimental.pallas import tpu as pltpu


def grapes_kernel(x_ref, w_ref, b_ref, y_ref):
    # x_ref: (TM, K)  activation tile (native dtype, natural row-major layout)
    # w_ref: (K, 1)   weight column (VMEM-resident, same block every grid step)
    # b_ref: (1, 1)   bias scalar in SMEM (f32)
    # y_ref: (TM, 1)  sigmoid output tile (f32); each row depends only on its
    #                 own input row (required for the no-pad ragged-M scheme).
    z = jnp.dot(x_ref[...], w_ref[...], preferred_element_type=jnp.float32)
    y_ref[...] = jax.nn.sigmoid(z + b_ref[0, 0])


def grapes_detector_forward(x, weight, bias, *, x_tile_budget_bytes=16 * 1024 * 1024):
    """Forward pass of GrapesDetector.

    x:      any array whose trailing dims flatten to n_feature (e.g. NCHW)
    weight: (1, n_feature)  -- nn.Linear.weight (kept in its own dtype, f32)
    bias:   (1,)            -- nn.Linear.bias
    returns (M, 1) float32 probabilities, M = x.size // n_feature.
    """
    k = weight.shape[-1]
    x2d = x.reshape(-1, k)                   # x.view(-1, in_features); keep native dtype
    m = x2d.shape[0]
    itemsize = x2d.dtype.itemsize

    # Budget-driven row tile: keep the double-buffered X tile ~16 MiB
    # (TM=2048 at K=1024 f32). Clamp to [8, 4096] and round to a sublane- and
    # MXU-friendly multiple.
    rows = x_tile_budget_bytes // (2 * k * itemsize)
    rows = int(max(8, min(4096, rows)))
    rows = (rows // 256) * 256 if rows >= 256 else (rows // 8) * 8
    # Small-M: a single block equal to the full array (escapes the (8,128) rule).
    tm_eff = m if m <= rows else rows
    num_tiles = pl.cdiv(m, tm_eff)           # ragged M: no padding, OOB writes dropped

    w_col = weight.reshape(k, 1)             # (K, 1): cheap reshape, no big transpose
    b_smem = bias.astype(jnp.float32).reshape(1, 1)

    # Right-size the VMEM limit from actual need (double-buffered X + tiny
    # output/weight buffers + compiler scratch slack); cap well under v7x's
    # 64 MiB physical VMEM.
    vmem_need = (2 * tm_eff * k * itemsize            # X double buffer
                 + 2 * tm_eff * 4                     # output double buffer
                 + 2 * k * w_col.dtype.itemsize       # weight buffer
                 + (8 << 20))                         # slack for compiler scratch
    vmem_limit = int(min(vmem_need, 48 << 20))

    y = pl.pallas_call(
        grapes_kernel,
        out_shape=jax.ShapeDtypeStruct((m, 1), jnp.float32),
        grid=(num_tiles,),
        in_specs=[
            pl.BlockSpec((tm_eff, k), lambda i: (i, 0)),            # streamed X tile
            pl.BlockSpec((k, 1), lambda i: (0, 0)),                 # resident weight column
            pl.BlockSpec(memory_space=pltpu.MemorySpace.SMEM),      # bias scalar in SMEM
        ],
        out_specs=pl.BlockSpec((tm_eff, 1), lambda i: (i, 0)),
        compiler_params=pltpu.CompilerParams(
            dimension_semantics=("parallel",),        # megacore sharding on v7x
            vmem_limit_bytes=vmem_limit,
        ),
        cost_estimate=pl.CostEstimate(
            flops=2 * m * k,
            transcendentals=m,
            bytes_accessed=m * k * itemsize + k * w_col.dtype.itemsize + m * 4,
        ),
    )(x2d, w_col, b_smem)

    return y


if __name__ == "__main__":
    # Small shapes consistent with the module: NCHW input flattened to (-1, n_feature).
    B, C, H, W = 2, 4, 16, 16
    n_feature = C * H * W  # 1024

    key = jax.random.PRNGKey(0)
    kx, kw, kb, kx2 = jax.random.split(key, 4)

    # PyTorch-style uniform(-1/sqrt(K), 1/sqrt(K)) init.
    bound = 1.0 / jnp.sqrt(jnp.float32(n_feature))
    weight = jax.random.uniform(kw, (1, n_feature), jnp.float32, -bound, bound)
    bias = jax.random.uniform(kb, (1,), jnp.float32, -bound, bound)

    # Case 1: tiny NCHW batch (M = 2, single full-array block).
    x = jax.random.normal(kx, (B, C, H, W), jnp.float32)
    y = jax.block_until_ready(grapes_detector_forward(x, weight, bias))
    ref = jax.nn.sigmoid(x.reshape(-1, n_feature) @ weight.T + bias)
    assert y.shape == (B, 1), y.shape
    assert jnp.allclose(y, ref, atol=1e-5, rtol=1e-5)

    # Case 2: multi-tile + ragged M (M = 2304, TM = 2048) to exercise the
    # no-padding grid pipeline with a partial last block.
    M2 = 2304
    x2 = jax.random.normal(kx2, (M2, n_feature), jnp.float32)
    y2 = jax.block_until_ready(grapes_detector_forward(x2, weight, bias))
    ref2 = jax.nn.sigmoid(x2 @ weight.T + bias)
    assert y2.shape == (M2, 1), y2.shape
    assert jnp.allclose(y2, ref2, atol=1e-5, rtol=1e-5)

    print("KERNEL_OK")
</pallas_src>

<mosaic_0001>
module attributes {stable_mosaic.version = 11 : i64} {
  func.func @grapes_kernel(%arg0: i32, %arg1: memref<2x1024xf32, #tpu.memory_space<vmem>>, %arg2: memref<1024x1xf32, #tpu.memory_space<vmem>>, %arg3: memref<1x1xf32, #tpu.memory_space<smem>>, %arg4: memref<2x1xf32, #tpu.memory_space<vmem>>) attributes {dimension_semantics = [#tpu.dimension_semantics<parallel>], iteration_bounds = array<i64: 1>, scalar_prefetch = 0 : i64, scratch_operands = 0 : i64, tpu.core_type = #tpu.core_type<tc>, window_params = [{transform_indices = @transform_0, window_bounds = array<i64: 2, 1024>}, {pipeline_mode = #tpu.pipeline_mode<synchronous>, transform_indices = @transform_1, window_bounds = array<i64: 1024, 1>}, {transform_indices = @transform_2, window_bounds = array<i64: 1, 1>}, {transform_indices = @transform_3, window_bounds = array<i64: 2, 1>}]} {
    %c0 = arith.constant 0 : index
    %c0_0 = arith.constant 0 : index
    %0 = vector.load %arg1[%c0, %c0_0] : memref<2x1024xf32, #tpu.memory_space<vmem>>, vector<2x1024xf32>
    %c0_1 = arith.constant 0 : index
    %c0_2 = arith.constant 0 : index
    %1 = vector.load %arg2[%c0_1, %c0_2] : memref<1024x1xf32, #tpu.memory_space<vmem>>, vector<1024x1xf32>
    %cst = arith.constant dense<0.000000e+00> : vector<2x1xf32>
    %2 = tpu.matmul %0, %1, %cst {dimension_numbers = #tpu.dot_dimension_numbers<[1], [0], [0], [1], [0, 0, 1, 1], [], []>} : vector<2x1024xf32>, vector<1024x1xf32>, vector<2x1xf32> -> vector<2x1xf32>
    %c0_3 = arith.constant 0 : index
    %c0_4 = arith.constant 0 : index
    %3 = memref.load %arg3[%c0_3, %c0_4] : memref<1x1xf32, #tpu.memory_space<smem>>
    %4 = vector.broadcast %3 : f32 to vector<2x1xf32>
    %5 = arith.addf %2, %4 : vector<2x1xf32>
    %6 = arith.negf %5 : vector<2x1xf32>
    %7 = math.exp %6 : vector<2x1xf32>
    %cst_5 = arith.constant 1.000000e+00 : f32
    %8 = vector.broadcast %cst_5 : f32 to vector<2x1xf32>
    %9 = arith.addf %8, %7 : vector<2x1xf32>
    %10 = arith.divf %8, %9 : vector<2x1xf32>
    %c0_6 = arith.constant 0 : index
    %c0_7 = arith.constant 0 : index
    %11 = vector.load %arg4[%c0_6, %c0_7] : memref<2x1xf32, #tpu.memory_space<vmem>>, vector<2x1xf32>
    tpu.vector_store %arg4[%c0_6, %c0_7], %10 {strides = array<i32>} : memref<2x1xf32, #tpu.memory_space<vmem>>, vector<2x1xf32>,
    return
  }
  func.func @transform_0(%arg0: i32) -> (i32, i32) {
    %c0_i32 = arith.constant 0 : i32
    %c0_i32_0 = arith.constant 0 : i32
    return %arg0, %c0_i32 : i32, i32
  }
  func.func @transform_1(%arg0: i32) -> (i32, i32) {
    %c0_i32 = arith.constant 0 : i32
    %c0_i32_0 = arith.constant 0 : i32
    %c0_i32_1 = arith.constant 0 : i32
    return %c0_i32, %c0_i32_0 : i32, i32
  }
  func.func @transform_2(%arg0: i32) -> (i32, i32) {
    %c0_i32 = arith.constant 0 : i32
    %c0_i32_0 = arith.constant 0 : i32
    %c0_i32_1 = arith.constant 0 : i32
    return %c0_i32, %c0_i32_0 : i32, i32
  }
  func.func @transform_3(%arg0: i32) -> (i32, i32) {
    %c0_i32 = arith.constant 0 : i32
    %c0_i32_0 = arith.constant 0 : i32
    return %arg0, %c0_i32 : i32, i32
  }
}

</mosaic_0001>

<llo_original>
// kernel: tpu_custom_call.1
$region0: #{tpu_custom_call.1}
  #allocation0 [shape = 'u32[]', space=smem, size = 0x4, offset = 0x4, fixed_abs, tag = 'smem constant byte address 0x4 - core index']
  #allocation1 [shape = 'u32[144,128]{1,0:T(1,128)}', space=vmem, size = 0x12000, scoped, tag = 'internal scratch']
  #allocation2 [shape = 'f32[1,1]{1,0:T(1,128)S(6)}', space=smem, size = 0x200, scoped, tag = 'scoped memory for tpu_custom_call.1']
  %s0 = inlined_call_operand.vmem [shape: f32[2,1024], index: 0, kind: input, shape index: {}]
  %s1 = inlined_call_operand.vmem [shape: f32[1024,1], index: 1, kind: input, shape index: {}]
  %s2 = inlined_call_operand.<no memory space> [shape: f32[1,1], index: 2, kind: input, shape index: {}]
  %s3 = inlined_call_operand.vmem [shape: f32[2,1], index: 3, kind: output, shape index: {}]
  %s4 = sld [smem:[#allocation0]]
  $region22: #{tpu_custom_call.1} parent=0
    _
  %s6 = ssub.s32 1, %s4
  %s7 = scalar_select 0, %s6, %s4
  %8 = sst [smem:[#allocation2]] %s2
  // Predicated region
  $region2: #{tpu_custom_call.1} parent=0 // pred_check
    _
  $region3: #{tpu_custom_call.1} parent=0 // pred_check_branch
    %10 = sbr.rel (0) target = $region5
  $region4: #{tpu_custom_call.1} parent=0 // pred_region
    _
  $region5: #{tpu_custom_call.1} parent=0 // pred_fallthru
    _
  // Predicated region
  $region6: #{tpu_custom_call.1} parent=0 // pred_check
    _
  $region7: #{tpu_custom_call.1} parent=0 // pred_check_branch
    %12 = sbr.rel (0) target = $region9
  $region8: #{tpu_custom_call.1} parent=0 // pred_region
    _
  $region9: #{tpu_custom_call.1} parent=0 // pred_fallthru
    _
  // Predicated region
  $region10: #{tpu_custom_call.1} parent=0 // pred_check
    _
  $region11: #{tpu_custom_call.1} parent=0 // pred_check_branch
    %14 = sbr.rel (0) target = $region13
  $region12: #{tpu_custom_call.1} parent=0 // pred_region
    _
  $region13: #{tpu_custom_call.1} parent=0 // pred_fallthru
    _
  %v15 = vld [vmem:[%s0] sm:$0xff]
  %v16 = vld [vmem:[%s0 + $0x8] sm:$0xff]
  %v17 = vld [vmem:[%s1] sm:$0xff]
  %v18 = vld [vmem:[%s1 + $0x8] sm:$0xff]
  %v19 = vld [vmem:[%s1 + $0x10] sm:$0xff]
  %v20 = vld [vmem:[%s1 + $0x18] sm:$0xff]
  %v21 = vld [vmem:[%s1 + $0x20] sm:$0xff]
  %v22 = vld [vmem:[%s1 + $0x28] sm:$0xff]
  %v23 = vld [vmem:[%s1 + $0x30] sm:$0xff]
  %v24 = vld [vmem:[%s1 + $0x38] sm:$0xff]
  %v25 = vld [vmem:[%s1 + $0x40] sm:$0xff]
  %v26 = vld [vmem:[%s1 + $0x48] sm:$0xff]
  %v27 = vld [vmem:[%s1 + $0x50] sm:$0xff]
  %v28 = vld [vmem:[%s1 + $0x58] sm:$0xff]
  %v29 = vld [vmem:[%s1 + $0x60] sm:$0xff]
  %v30 = vld [vmem:[%s1 + $0x68] sm:$0xff]
  %v31 = vld [vmem:[%s1 + $0x70] sm:$0xff]
  %v32 = vld [vmem:[%s1 + $0x78] sm:$0xff]
  %v33 = vld [vmem:[%s1 + $0x80] sm:$0xff]
  %v34 = vld [vmem:[%s1 + $0x88] sm:$0xff]
  %v35 = vld [vmem:[%s1 + $0x90] sm:$0xff]
  %v36 = vld [vmem:[%s1 + $0x98] sm:$0xff]
  %v37 = vld [vmem:[%s1 + $0xa0] sm:$0xff]
  %v38 = vld [vmem:[%s1 + $0xa8] sm:$0xff]
  %v39 = vld [vmem:[%s1 + $0xb0] sm:$0xff]
  %v40 = vld [vmem:[%s1 + $0xb8] sm:$0xff]
  %v41 = vld [vmem:[%s1 + $0xc0] sm:$0xff]
  %v42 = vld [vmem:[%s1 + $0xc8] sm:$0xff]
  %v43 = vld [vmem:[%s1 + $0xd0] sm:$0xff]
  %v44 = vld [vmem:[%s1 + $0xd8] sm:$0xff]
  %v45 = vld [vmem:[%s1 + $0xe0] sm:$0xff]
  %v46 = vld [vmem:[%s1 + $0xe8] sm:$0xff]
  %v47 = vld [vmem:[%s1 + $0xf0] sm:$0xff]
  %v48 = vld [vmem:[%s1 + $0xf8] sm:$0xff]
  %v49 = vld [vmem:[%s1 + $0x100] sm:$0xff]
  %v50 = vld [vmem:[%s1 + $0x108] sm:$0xff]
  %v51 = vld [vmem:[%s1 + $0x110] sm:$0xff]
  %v52 = vld [vmem:[%s1 + $0x118] sm:$0xff]
  %v53 = vld [vmem:[%s1 + $0x120] sm:$0xff]
  %v54 = vld [vmem:[%s1 + $0x128] sm:$0xff]
  %v55 = vld [vmem:[%s1 + $0x130] sm:$0xff]
  %v56 = vld [vmem:[%s1 + $0x138] sm:$0xff]
  %v57 = vld [vmem:[%s1 + $0x140] sm:$0xff]
  %v58 = vld [vmem:[%s1 + $0x148] sm:$0xff]
  %v59 = vld [vmem:[%s1 + $0x150] sm:$0xff]
  %v60 = vld [vmem:[%s1 + $0x158] sm:$0xff]
  %v61 = vld [vmem:[%s1 + $0x160] sm:$0xff]
  %v62 = vld [vmem:[%s1 + $0x168] sm:$0xff]
  %v63 = vld [vmem:[%s1 + $0x170] sm:$0xff]
  %v64 = vld [vmem:[%s1 + $0x178] sm:$0xff]
  %v65 = vld [vmem:[%s1 + $0x180] sm:$0xff]
  %v66 = vld [vmem:[%s1 + $0x188] sm:$0xff]
  %v67 = vld [vmem:[%s1 + $0x190] sm:$0xff]
  %v68 = vld [vmem:[%s1 + $0x198] sm:$0xff]
  %v69 = vld [vmem:[%s1 + $0x1a0] sm:$0xff]
  %v70 = vld [vmem:[%s1 + $0x1a8] sm:$0xff]
  %v71 = vld [vmem:[%s1 + $0x1b0] sm:$0xff]
  %v72 = vld [vmem:[%s1 + $0x1b8] sm:$0xff]
  %v73 = vld [vmem:[%s1 + $0x1c0] sm:$0xff]
  %v74 = vld [vmem:[%s1 + $0x1c8] sm:$0xff]
  %v75 = vld [vmem:[%s1 + $0x1d0] sm:$0xff]
  %v76 = vld [vmem:[%s1 + $0x1d8] sm:$0xff]
  %v77 = vld [vmem:[%s1 + $0x1e0] sm:$0xff]
  %v78 = vld [vmem:[%s1 + $0x1e8] sm:$0xff]
  %v79 = vld [vmem:[%s1 + $0x1f0] sm:$0xff]
  %v80 = vld [vmem:[%s1 + $0x1f8] sm:$0xff]
  %v81 = vld [vmem:[%s1 + $0x200] sm:$0xff]
  %v82 = vld [vmem:[%s1 + $0x208] sm:$0xff]
  %v83 = vld [vmem:[%s1 + $0x210] sm:$0xff]
  %v84 = vld [vmem:[%s1 + $0x218] sm:$0xff]
  %v85 = vld [vmem:[%s1 + $0x220] sm:$0xff]
  %v86 = vld [vmem:[%s1 + $0x228] sm:$0xff]
  %v87 = vld [vmem:[%s1 + $0x230] sm:$0xff]
  %v88 = vld [vmem:[%s1 + $0x238] sm:$0xff]
  %v89 = vld [vmem:[%s1 + $0x240] sm:$0xff]
  %v90 = vld [vmem:[%s1 + $0x248] sm:$0xff]
  %v91 = vld [vmem:[%s1 + $0x250] sm:$0xff]
  %v92 = vld [vmem:[%s1 + $0x258] sm:$0xff]
  %v93 = vld [vmem:[%s1 + $0x260] sm:$0xff]
  %v94 = vld [vmem:[%s1 + $0x268] sm:$0xff]
  %v95 = vld [vmem:[%s1 + $0x270] sm:$0xff]
  %v96 = vld [vmem:[%s1 + $0x278] sm:$0xff]
  %v97 = vld [vmem:[%s1 + $0x280] sm:$0xff]
  %v98 = vld [vmem:[%s1 + $0x288] sm:$0xff]
  %v99 = vld [vmem:[%s1 + $0x290] sm:$0xff]
  %v100 = vld [vmem:[%s1 + $0x298] sm:$0xff]
  %v101 = vld [vmem:[%s1 + $0x2a0] sm:$0xff]
  %v102 = vld [vmem:[%s1 + $0x2a8] sm:$0xff]
  %v103 = vld [vmem:[%s1 + $0x2b0] sm:$0xff]
  %v104 = vld [vmem:[%s1 + $0x2b8] sm:$0xff]
  %v105 = vld [vmem:[%s1 + $0x2c0] sm:$0xff]
  %v106 = vld [vmem:[%s1 + $0x2c8] sm:$0xff]
  %v107 = vld [vmem:[%s1 + $0x2d0] sm:$0xff]
  %v108 = vld [vmem:[%s1 + $0x2d8] sm:$0xff]
  %v109 = vld [vmem:[%s1 + $0x2e0] sm:$0xff]
  %v110 = vld [vmem:[%s1 + $0x2e8] sm:$0xff]
  %v111 = vld [vmem:[%s1 + $0x2f0] sm:$0xff]
  %v112 = vld [vmem:[%s1 + $0x2f8] sm:$0xff]
  %v113 = vld [vmem:[%s1 + $0x300] sm:$0xff]
  %v114 = vld [vmem:[%s1 + $0x308] sm:$0xff]
  %v115 = vld [vmem:[%s1 + $0x310] sm:$0xff]
  %v116 = vld [vmem:[%s1 + $0x318] sm:$0xff]
  %v117 = vld [vmem:[%s1 + $0x320] sm:$0xff]
  %v118 = vld [vmem:[%s1 + $0x328] sm:$0xff]
  %v119 = vld [vmem:[%s1 + $0x330] sm:$0xff]
  %v120 = vld [vmem:[%s1 + $0x338] sm:$0xff]
  %v121 = vld [vmem:[%s1 + $0x340] sm:$0xff]
  %v122 = vld [vmem:[%s1 + $0x348] sm:$0xff]
  %v123 = vld [vmem:[%s1 + $0x350] sm:$0xff]
  %v124 = vld [vmem:[%s1 + $0x358] sm:$0xff]
  %v125 = vld [vmem:[%s1 + $0x360] sm:$0xff]
  %v126 = vld [vmem:[%s1 + $0x368] sm:$0xff]
  %v127 = vld [vmem:[%s1 + $0x370] sm:$0xff]
  %v128 = vld [vmem:[%s1 + $0x378] sm:$0xff]
  %v129 = vld [vmem:[%s1 + $0x380] sm:$0xff]
  %v130 = vld [vmem:[%s1 + $0x388] sm:$0xff]
  %v131 = vld [vmem:[%s1 + $0x390] sm:$0xff]
  %v132 = vld [vmem:[%s1 + $0x398] sm:$0xff]
  %v133 = vld [vmem:[%s1 + $0x3a0] sm:$0xff]
  %v134 = vld [vmem:[%s1 + $0x3a8] sm:$0xff]
  %v135 = vld [vmem:[%s1 + $0x3b0] sm:$0xff]
  %v136 = vld [vmem:[%s1 + $0x3b8] sm:$0xff]
  %v137 = vld [vmem:[%s1 + $0x3c0] sm:$0xff]
  %v138 = vld [vmem:[%s1 + $0x3c8] sm:$0xff]
  %v139 = vld [vmem:[%s1 + $0x3d0] sm:$0xff]
  %v140 = vld [vmem:[%s1 + $0x3d8] sm:$0xff]
  %v141 = vld [vmem:[%s1 + $0x3e0] sm:$0xff]
  %v142 = vld [vmem:[%s1 + $0x3e8] sm:$0xff]
  %v143 = vld [vmem:[%s1 + $0x3f0] sm:$0xff]
  %v144 = vld [vmem:[%s1 + $0x3f8] sm:$0xff]
  %s145 = sld [smem:[#allocation2]]
  %v146 = vstv %s145
  %v149 = vcombine.high %v15, %v15
  %v151 = vunpack.c.l.s4 1983009808
  %v152 = vunpack.c.0.s8 %v151
  %v153 = vlaneseq
  %v154 = vshrl.u32 %v153, 7
  %v155 = vsub.s32 %v152, %v154
  %v156 = vrot.slane %v15, %v155
  %v158 = vunpack.c.l.s4 1983009808
  %v159 = vunpack.c.0.s8 %v158
  %v160 = vlaneseq
  %v161 = vshrl.u32 %v160, 7
  %v162 = vsub.s32 %v159, %v161
  %v163 = vrot.slane %v149, %v162
  %v164 = vcombine.high %v156, %v156
  %v165 = vcombine.high %v163, %v163
  %v166 = vcombine.high %v16, %v16
  %v168 = vunpack.c.l.s4 1983009808
  %v169 = vunpack.c.0.s8 %v168
  %v170 = vlaneseq
  %v171 = vshrl.u32 %v170, 7
  %v172 = vsub.s32 %v169, %v171
  %v173 = vrot.slane %v16, %v172
  %v175 = vunpack.c.l.s4 1983009808
  %v176 = vunpack.c.0.s8 %v175
  %v177 = vlaneseq
  %v178 = vshrl.u32 %v177, 7
  %v179 = vsub.s32 %v176, %v178
  %v180 = vrot.slane %v166, %v179
  %v181 = vcombine.high %v173, %v173
  %v182 = vcombine.high %v180, %v180
  %191 = vmatprep.subr.mxu0 0.0
  %192 = vmatpush1.msra.mxu0 %v17
  %193 = vmatprep.subr.mxu0 0.0
  %194 = vmatpush1.msra.mxu0 %v18
  %195 = vmatprep.subr.mxu0 0.0
  %196 = vmatpush1.msra.mxu0 %v19
  %197 = vmatprep.subr.mxu0 0.0
  %198 = vmatpush1.msra.mxu0 %v20
  %199 = vmatprep.subr.mxu0 0.0
  %200 = vmatpush1.msra.mxu0 %v21
  %201 = vmatprep.subr.mxu0 0.0
  %202 = vmatpush1.msra.mxu0 %v22
  %203 = vmatprep.subr.mxu0 0.0
  %204 = vmatpush1.msra.mxu0 %v23
  %205 = vmatprep.subr.mxu0 0.0
  %206 = vmatpush1.msra.mxu0 %v24
  %207 = vmatprep.subr.mxu0 0.0
  %208 = vmatpush1.msra.mxu0 %v25
  %209 = vmatprep.subr.mxu0 0.0
  %210 = vmatpush1.msra.mxu0 %v26
  %211 = vmatprep.subr.mxu0 0.0
  %212 = vmatpush1.msra.mxu0 %v27
  %213 = vmatprep.subr.mxu0 0.0
  %214 = vmatpush1.msra.mxu0 %v28
  %215 = vmatprep.subr.mxu0 0.0
  %216 = vmatpush1.msra.mxu0 %v29
  %217 = vmatprep.subr.mxu0 0.0
  %218 = vmatpush1.msra.mxu0 %v30
  %219 = vmatprep.subr.mxu0 0.0
  %220 = vmatpush1.msra.mxu0 %v31
  %221 = vmatprep.subr.mxu0 0.0
  %222 = vmatpush1.msra.mxu0 %v32
  %223 = vmatprep.subr.mxu0 0.0
  %224 = vmatpush1.msra.mxu0 %v33
  %225 = vmatprep.subr.mxu0 0.0
  %226 = vmatpush1.msra.mxu0 %v34
  %227 = vmatprep.subr.mxu0 0.0
  %228 = vmatpush1.msra.mxu0 %v35
  %229 = vmatprep.subr.mxu0 0.0
  %230 = vmatpush1.msra.mxu0 %v36
  %231 = vmatprep.subr.mxu0 0.0
  %232 = vmatpush1.msra.mxu0 %v37
  %233 = vmatprep.subr.mxu0 0.0
  %234 = vmatpush1.msra.mxu0 %v38
  %235 = vmatprep.subr.mxu0 0.0
  %236 = vmatpush1.msra.mxu0 %v39
  %237 = vmatprep.subr.mxu0 0.0
  %238 = vmatpush1.msra.mxu0 %v40
  %239 = vmatprep.subr.mxu0 0.0
  %240 = vmatpush1.msra.mxu0 %v41
  %241 = vmatprep.subr.mxu0 0.0
  %242 = vmatpush1.msra.mxu0 %v42
  %243 = vmatprep.subr.mxu0 0.0
  %244 = vmatpush1.msra.mxu0 %v43
  %245 = vmatprep.subr.mxu0 0.0
  %246 = vmatpush1.msra.mxu0 %v44
  %247 = vmatprep.subr.mxu0 0.0
  %248 = vmatpush1.msra.mxu0 %v45
  %249 = vmatprep.subr.mxu0 0.0
  %250 = vmatpush1.msra.mxu0 %v46
  %251 = vmatprep.subr.mxu0 0.0
  %252 = vmatpush1.msra.mxu0 %v47
  %253 = vmatprep.subr.mxu0 0.0
  %254 = vmatpush1.msra.mxu0 %v48
  %255 = vmatprep.mubr.f32.mxu0 %v164
  %256 = vmatmul.mubr.f32.gmra.mrb[0].mxu0 %v156
  %v257 = vpop.f32.mrb[0].mxu0
  %v258 = vadd.f32 %v146, %v257
  %v259 = vpop.f32.mrb[0].mxu0
  %260 = vdwg.mxu0
  %261 = vmatprep.subr.mxu0 0.0
  %262 = vmatpush1.msra.mxu0 %v49
  %263 = vmatprep.subr.mxu0 0.0
  %264 = vmatpush1.msra.mxu0 %v50
  %265 = vmatprep.subr.mxu0 0.0
  %266 = vmatpush1.msra.mxu0 %v51
  %267 = vmatprep.subr.mxu0 0.0
  %268 = vmatpush1.msra.mxu0 %v52
  %269 = vmatprep.subr.mxu0 0.0
  %270 = vmatpush1.msra.mxu0 %v53
  %271 = vmatprep.subr.mxu0 0.0
  %272 = vmatpush1.msra.mxu0 %v54
  %273 = vmatprep.subr.mxu0 0.0
  %274 = vmatpush1.msra.mxu0 %v55
  %275 = vmatprep.subr.mxu0 0.0
  %276 = vmatpush1.msra.mxu0 %v56
  %277 = vmatprep.subr.mxu0 0.0
  %278 = vmatpush1.msra.mxu0 %v57
  %279 = vmatprep.subr.mxu0 0.0
  %280 = vmatpush1.msra.mxu0 %v58
  %281 = vmatprep.subr.mxu0 0.0
  %282 = vmatpush1.msra.mxu0 %v59
  %283 = vmatprep.subr.mxu0 0.0
  %284 = vmatpush1.msra.mxu0 %v60
  %285 = vmatprep.subr.mxu0 0.0
  %286 = vmatpush1.msra.mxu0 %v61
  %287 = vmatprep.subr.mxu0 0.0
  %288 = vmatpush1.msra.mxu0 %v62
  %289 = vmatprep.subr.mxu0 0.0
  %290 = vmatpush1.msra.mxu0 %v63
  %291 = vmatprep.subr.mxu0 0.0
  %292 = vmatpush1.msra.mxu0 %v64
  %293 = vmatprep.subr.mxu0 0.0
  %294 = vmatpush1.msra.mxu0 %v65
  %295 = vmatprep.subr.mxu0 0.0
  %296 = vmatpush1.msra.mxu0 %v66
  %297 = vmatprep.subr.mxu0 0.0
  %298 = vmatpush1.msra.mxu0 %v67
  %299 = vmatprep.subr.mxu0 0.0
  %300 = vmatpush1.msra.mxu0 %v68
  %301 = vmatprep.subr.mxu0 0.0
  %302 = vmatpush1.msra.mxu0 %v69
  %303 = vmatprep.subr.mxu0 0.0
  %304 = vmatpush1.msra.mxu0 %v70
  %305 = vmatprep.subr.mxu0 0.0
  %306 = vmatpush1.msra.mxu0 %v71
  %307 = vmatprep.subr.mxu0 0.0
  %308 = vmatpush1.msra.mxu0 %v72
  %309 = vmatprep.subr.mxu0 0.0
  %310 = vmatpush1.msra.mxu0 %v73
  %311 = vmatprep.subr.mxu0 0.0
  %312 = vmatpush1.msra.mxu0 %v74
  %313 = vmatprep.subr.mxu0 0.0
  %314 = vmatpush1.msra.mxu0 %v75
  %315 = vmatprep.subr.mxu0 0.0
  %316 = vmatpush1.msra.mxu0 %v76
  %317 = vmatprep.subr.mxu0 0.0
  %318 = vmatpush1.msra.mxu0 %v77
  %319 = vmatprep.subr.mxu0 0.0
  %320 = vmatpush1.msra.mxu0 %v78
  %321 = vmatprep.subr.mxu0 0.0
  %322 = vmatpush1.msra.mxu0 %v79
  %323 = vmatprep.subr.mxu0 0.0
  %324 = vmatpush1.msra.mxu0 %v80
  %325 = vmatprep.mubr.f32.mxu0 %v165
  %326 = vmatmul.mubr.f32.gmra.mrb[0].mxu0 %v163
  %v327 = vpop.f32.mrb[0].mxu0
  %v328 = vadd.f32 %v258, %v327
  %v329 = vpop.f32.mrb[0].mxu0
  %330 = vdwg.mxu0
  %331 = vmatprep.subr.mxu0 0.0
  %332 = vmatpush1.msra.mxu0 %v81
  %333 = vmatprep.subr.mxu0 0.0
  %334 = vmatpush1.msra.mxu0 %v82
  %335 = vmatprep.subr.mxu0 0.0
  %336 = vmatpush1.msra.mxu0 %v83
  %337 = vmatprep.subr.mxu0 0.0
  %338 = vmatpush1.msra.mxu0 %v84
  %339 = vmatprep.subr.mxu0 0.0
  %340 = vmatpush1.msra.mxu0 %v85
  %341 = vmatprep.subr.mxu0 0.0
  %342 = vmatpush1.msra.mxu0 %v86
  %343 = vmatprep.subr.mxu0 0.0
  %344 = vmatpush1.msra.mxu0 %v87
  %345 = vmatprep.subr.mxu0 0.0
  %346 = vmatpush1.msra.mxu0 %v88
  %347 = vmatprep.subr.mxu0 0.0
  %348 = vmatpush1.msra.mxu0 %v89
  %349 = vmatprep.subr.mxu0 0.0
  %350 = vmatpush1.msra.mxu0 %v90
  %351 = vmatprep.subr.mxu0 0.0
  %352 = vmatpush1.msra.mxu0 %v91
  %353 = vmatprep.subr.mxu0 0.0
  %354 = vmatpush1.msra.mxu0 %v92
  %355 = vmatprep.subr.mxu0 0.0
  %356 = vmatpush1.msra.mxu0 %v93
  %357 = vmatprep.subr.mxu0 0.0
  %358 = vmatpush1.msra.mxu0 %v94
  %359 = vmatprep.subr.mxu0 0.0
  %360 = vmatpush1.msra.mxu0 %v95
  %361 = vmatprep.subr.mxu0 0.0
  %362 = vmatpush1.msra.mxu0 %v96
  %363 = vmatprep.subr.mxu0 0.0
  %364 = vmatpush1.msra.mxu0 %v97
  %365 = vmatprep.subr.mxu0 0.0
  %366 = vmatpush1.msra.mxu0 %v98
  %367 = vmatprep.subr.mxu0 0.0
  %368 = vmatpush1.msra.mxu0 %v99
  %369 = vmatprep.subr.mxu0 0.0
  %370 = vmatpush1.msra.mxu0 %v100
  %371 = vmatprep.subr.mxu0 0.0
  %372 = vmatpush1.msra.mxu0 %v101
  %373 = vmatprep.subr.mxu0 0.0
  %374 = vmatpush1.msra.mxu0 %v102
  %375 = vmatprep.subr.mxu0 0.0
  %376 = vmatpush1.msra.mxu0 %v103
  %377 = vmatprep.subr.mxu0 0.0
  %378 = vmatpush1.msra.mxu0 %v104
  %379 = vmatprep.subr.mxu0 0.0
  %380 = vmatpush1.msra.mxu0 %v105
  %381 = vmatprep.subr.mxu0 0.0
  %382 = vmatpush1.msra.mxu0 %v106
  %383 = vmatprep.subr.mxu0 0.0
  %384 = vmatpush1.msra.mxu0 %v107
  %385 = vmatprep.subr.mxu0 0.0
  %386 = vmatpush1.msra.mxu0 %v108
  %387 = vmatprep.subr.mxu0 0.0
  %388 = vmatpush1.msra.mxu0 %v109
  %389 = vmatprep.subr.mxu0 0.0
  %390 = vmatpush1.msra.mxu0 %v110
  %391 = vmatprep.subr.mxu0 0.0
  %392 = vmatpush1.msra.mxu0 %v111
  %393 = vmatprep.subr.mxu0 0.0
  %394 = vmatpush1.msra.mxu0 %v112
  %395 = vmatprep.mubr.f32.mxu0 %v181
  %396 = vmatmul.mubr.f32.gmra.mrb[0].mxu0 %v173
  %v397 = vpop.f32.mrb[0].mxu0
  %v398 = vadd.f32 %v328, %v397
  %v399 = vpop.f32.mrb[0].mxu0
  %400 = vdwg.mxu0
  %401 = vmatprep.subr.mxu0 0.0
  %402 = vmatpush1.msra.mxu0 %v113
  %403 = vmatprep.subr.mxu0 0.0
  %404 = vmatpush1.msra.mxu0 %v114
  %405 = vmatprep.subr.mxu0 0.0
  %406 = vmatpush1.msra.mxu0 %v115
  %407 = vmatprep.subr.mxu0 0.0
  %408 = vmatpush1.msra.mxu0 %v116
  %409 = vmatprep.subr.mxu0 0.0
  %410 = vmatpush1.msra.mxu0 %v117
  %411 = vmatprep.subr.mxu0 0.0
  %412 = vmatpush1.msra.mxu0 %v118
  %413 = vmatprep.subr.mxu0 0.0
  %414 = vmatpush1.msra.mxu0 %v119
  %415 = vmatprep.subr.mxu0 0.0
  %416 = vmatpush1.msra.mxu0 %v120
  %417 = vmatprep.subr.mxu0 0.0
  %418 = vmatpush1.msra.mxu0 %v121
  %419 = vmatprep.subr.mxu0 0.0
  %420 = vmatpush1.msra.mxu0 %v122
  %421 = vmatprep.subr.mxu0 0.0
  %422 = vmatpush1.msra.mxu0 %v123
  %423 = vmatprep.subr.mxu0 0.0
  %424 = vmatpush1.msra.mxu0 %v124
  %425 = vmatprep.subr.mxu0 0.0
  %426 = vmatpush1.msra.mxu0 %v125
  %427 = vmatprep.subr.mxu0 0.0
  %428 = vmatpush1.msra.mxu0 %v126
  %429 = vmatprep.subr.mxu0 0.0
  %430 = vmatpush1.msra.mxu0 %v127
  %431 = vmatprep.subr.mxu0 0.0
  %432 = vmatpush1.msra.mxu0 %v128
  %433 = vmatprep.subr.mxu0 0.0
  %434 = vmatpush1.msra.mxu0 %v129
  %435 = vmatprep.subr.mxu0 0.0
  %436 = vmatpush1.msra.mxu0 %v130
  %437 = vmatprep.subr.mxu0 0.0
  %438 = vmatpush1.msra.mxu0 %v131
  %439 = vmatprep.subr.mxu0 0.0
  %440 = vmatpush1.msra.mxu0 %v132
  %441 = vmatprep.subr.mxu0 0.0
  %442 = vmatpush1.msra.mxu0 %v133
  %443 = vmatprep.subr.mxu0 0.0
  %444 = vmatpush1.msra.mxu0 %v134
  %445 = vmatprep.subr.mxu0 0.0
  %446 = vmatpush1.msra.mxu0 %v135
  %447 = vmatprep.subr.mxu0 0.0
  %448 = vmatpush1.msra.mxu0 %v136
  %449 = vmatprep.subr.mxu0 0.0
  %450 = vmatpush1.msra.mxu0 %v137
  %451 = vmatprep.subr.mxu0 0.0
  %452 = vmatpush1.msra.mxu0 %v138
  %453 = vmatprep.subr.mxu0 0.0
  %454 = vmatpush1.msra.mxu0 %v139
  %455 = vmatprep.subr.mxu0 0.0
  %456 = vmatpush1.msra.mxu0 %v140
  %457 = vmatprep.subr.mxu0 0.0
  %458 = vmatpush1.msra.mxu0 %v141
  %459 = vmatprep.subr.mxu0 0.0
  %460 = vmatpush1.msra.mxu0 %v142
  %461 = vmatprep.subr.mxu0 0.0
  %462 = vmatpush1.msra.mxu0 %v143
  %463 = vmatprep.subr.mxu0 0.0
  %464 = vmatpush1.msra.mxu0 %v144
  %465 = vmatprep.mubr.f32.mxu0 %v182
  %466 = vmatmul.mubr.f32.gmra.mrb[0].mxu0 %v180
  %v467 = vpop.f32.mrb[0].mxu0
  %v468 = vadd.f32 %v398, %v467
  %v469 = vpop.f32.mrb[0].mxu0
  %470 = vdwg.mxu0
  %v471 = vxor.u32 %v468, 2147483648
  %v472 = vmul.f32 %v471, 1.442695
  %v473 = vpow.pop %v472
  %v474 = vadd.f32 %v473, 1.0
  %v475 = vrcp.pop %v474
  %v476 = vmul.f32 1.0, %v475
  %vm477 = vcmask 1024
  %478 = vst.msk [vmem:[%s3] sm:$0x3] %vm477, %v476
  // Predicated region
  $region14: #{tpu_custom_call.1} parent=0 // pred_check
    _
  $region15: #{tpu_custom_call.1} parent=0 // pred_check_branch
    %480 = sbr.rel (0) target = $region17
  $region16: #{tpu_custom_call.1} parent=0 // pred_region
    _
  $region17: #{tpu_custom_call.1} parent=0 // pred_fallthru
    _
  // Predicated region
  $region18: #{tpu_custom_call.1} parent=0 // pred_check
    _
  $region19: #{tpu_custom_call.1} parent=0 // pred_check_branch
    %482 = sbr.rel (0) target = $region21
  $region20: #{tpu_custom_call.1} parent=0 // pred_region
    _
  $region21: #{tpu_custom_call.1} parent=0 // pred_fallthru
    _

</llo_original>
